<compile_context>
chip_gen: v5e
topology: v5e:2x2
jax: 0.10.0
libtpu: 0.0.40
codegen_flags: <defaults>
</compile_context>

<pallas_src>
import jax
import jax.numpy as jnp
from jax import lax
from jax.experimental import pallas as pl
from jax.experimental.pallas import tpu as pltpu

_LANE = 128     # lane width
_SUBLANE = 8    # f32 sublane height


def _linear_kernel(x_ref, w_ref, b_ref, o_ref):
    # x_ref: (tm, H)   -- H on lanes
    # w_ref: (Cp, H)   -- lane-dense weight (torch layout, no transpose)
    # b_ref: (1, Cp)
    # o_ref: (tm, Cp)  -- lane-dense output (Cp is a multiple of 128)
    acc = lax.dot_general(
        x_ref[...], w_ref[...],
        dimension_numbers=(((1,), (1,)), ((), ())),   # x @ w.T on the MXU
        preferred_element_type=jnp.float32)
    o_ref[...] = (acc + b_ref[...].astype(jnp.float32)).astype(o_ref.dtype)


def _round_up(x, m):
    return ((x + m - 1) // m) * m


def _pick_tm(M, H, Cp, x_bytes, out_bytes, w_bytes,
             vmem_budget_bytes=24 * 1024 * 1024):
    """Largest row tile whose double-buffered tiles fit a conservative VMEM
    budget (safe for v7x's 32 MiB scoped / 64 MiB physical VMEM)."""
    fixed = 2 * Cp * H * w_bytes + 2 * Cp * 4        # resident weight + bias
    avail = max(vmem_budget_bytes - fixed, 1 << 20)
    per_row = 2 * H * x_bytes + 2 * Cp * out_bytes   # double-buffered x + out rows
    tm = avail // per_row
    tm = min(int(tm), 1024)                          # amortizes ~600 cyc/grid step
    tm = min(tm, max(_SUBLANE, pl.cdiv(M, 2)))       # keep >=2 grid steps (v7x: 2 TCs)
    tm = max(_SUBLANE, (tm // _SUBLANE) * _SUBLANE)
    return tm


def pooler_start_logits(hidden_states, weight, bias, p_mask=None, *,
                        compute_dtype=None, out_dtype=None, tm=None,
                        interpret=False):
    """Equivalent of PoolerStartLogits.forward: dense(hidden_states).

    hidden_states: [B, S, H]
    weight:        [C, H]   (torch nn.Linear layout; kept lane-dense)
    bias:          [C]
    """
    # TODO(synk): p_mask is accepted for API parity but intentionally unused --
    # the provided module's forward never applies it.
    B, S, H = hidden_states.shape
    C = weight.shape[0]
    M = B * S

    out_dtype = jnp.dtype(out_dtype or hidden_states.dtype)
    if compute_dtype is not None:
        # Optional bf16 streaming: halves HBM bytes; accumulation stays f32.
        hidden_states = hidden_states.astype(compute_dtype)
        weight = weight.astype(compute_dtype)

    x_bytes = hidden_states.dtype.itemsize
    w_bytes = weight.dtype.itemsize
    out_bytes = out_dtype.itemsize

    # Lane-dense output: pad classes to a multiple of 128 so stores are
    # full-width vst (not vst.msk); padded columns sliced off in XLA below.
    Cp = _round_up(C, _LANE)

    if tm is None:
        tm = _pick_tm(M, H, Cp, x_bytes, out_bytes, w_bytes)
    tm = max(_SUBLANE, _round_up(tm, _SUBLANE))

    # Ragged tail: pad token rows to a multiple of tm (no divisibility assert).
    Mp = _round_up(M, tm)
    x2d = hidden_states.reshape(M, H)
    if Mp != M:
        x2d = jnp.pad(x2d, ((0, Mp - M), (0, 0)))

    w = weight
    b = bias.reshape(1, C)
    if Cp != C:
        w = jnp.pad(w, ((0, Cp - C), (0, 0)))
        b = jnp.pad(b, ((0, 0), (0, Cp - C)))

    grid = (Mp // tm,)

    # Double-buffered x & out tiles + (conservatively double-counted) weight/bias.
    vmem_needed = (2 * tm * H * x_bytes + 2 * tm * Cp * out_bytes
                   + 2 * Cp * H * w_bytes + 2 * Cp * b.dtype.itemsize)
    vmem_limit = int(vmem_needed * 1.25) + (2 << 20)
    vmem_limit = max(16 * 1024 * 1024, min(vmem_limit, 48 * 1024 * 1024))

    cost = pl.CostEstimate(
        flops=2 * M * H * C,
        transcendentals=0,
        bytes_accessed=(M * H * x_bytes + C * H * w_bytes
                        + C * bias.dtype.itemsize + M * C * out_bytes))

    out2d = pl.pallas_call(
        _linear_kernel,
        out_shape=jax.ShapeDtypeStruct((Mp, Cp), out_dtype),
        grid_spec=pltpu.PrefetchScalarGridSpec(
            num_scalar_prefetch=0,
            grid=grid,
            in_specs=[
                pl.BlockSpec((tm, H), lambda i: (i, 0)),    # token tile
                pl.BlockSpec((Cp, H), lambda i: (0, 0)),    # resident lane-dense weight
                pl.BlockSpec((1, Cp), lambda i: (0, 0)),    # resident bias
            ],
            out_specs=pl.BlockSpec((tm, Cp), lambda i: (i, 0)),
        ),
        compiler_params=pltpu.CompilerParams(
            dimension_semantics=("parallel",),
            vmem_limit_bytes=vmem_limit),
        cost_estimate=cost,
        interpret=interpret,
    )(x2d, w, b)

    return out2d[:M, :C].reshape(B, S, C)


if __name__ == "__main__":
    # Small shapes consistent with the module: batch=2, seq=8, hidden=32, classes=8
    B, S, H, C = 2, 8, 32, 8

    key = jax.random.PRNGKey(0)
    k_x, k_w, k_b = jax.random.split(key, 3)

    hidden_states = jax.random.normal(k_x, (B, S, H), dtype=jnp.float32)
    # Deterministic synthetic Linear params (nn.Linear(hidden_size, num_classes))
    weight = jax.random.normal(k_w, (C, H), dtype=jnp.float32) * 0.02
    bias = jax.random.normal(k_b, (C,), dtype=jnp.float32) * 0.02

    out = pooler_start_logits(hidden_states, weight, bias)
    out = jax.block_until_ready(out)

    # Reference check in plain JAX
    ref = hidden_states @ weight.T + bias
    assert out.shape == (B, S, C)
    assert jnp.allclose(out, ref, atol=1e-5, rtol=1e-5), "mismatch vs reference"

    print("KERNEL_OK")
</pallas_src>

<mosaic_0001>
module attributes {stable_mosaic.version = 11 : i64} {
  func.func @_linear_kernel(%arg0: i32, %arg1: memref<8x32xf32, #tpu.memory_space<vmem>>, %arg2: memref<128x32xf32, #tpu.memory_space<vmem>>, %arg3: memref<1x128xf32, #tpu.memory_space<vmem>>, %arg4: memref<8x128xf32, #tpu.memory_space<vmem>>) attributes {dimension_semantics = [#tpu.dimension_semantics<parallel>], iteration_bounds = array<i64: 2>, scalar_prefetch = 0 : i64, scratch_operands = 0 : i64, tpu.core_type = #tpu.core_type<tc>, window_params = [{transform_indices = @transform_0, window_bounds = array<i64: 8, 32>}, {pipeline_mode = #tpu.pipeline_mode<synchronous>, transform_indices = @transform_1, window_bounds = array<i64: 128, 32>}, {pipeline_mode = #tpu.pipeline_mode<synchronous>, transform_indices = @transform_2, window_bounds = array<i64: 1, 128>}, {transform_indices = @transform_3, window_bounds = array<i64: 8, 128>}]} {
    %c0 = arith.constant 0 : index
    %c0_0 = arith.constant 0 : index
    %0 = vector.load %arg1[%c0, %c0_0] : memref<8x32xf32, #tpu.memory_space<vmem>>, vector<8x32xf32>
    %c0_1 = arith.constant 0 : index
    %c0_2 = arith.constant 0 : index
    %1 = vector.load %arg2[%c0_1, %c0_2] : memref<128x32xf32, #tpu.memory_space<vmem>>, vector<128x32xf32>
    %cst = arith.constant dense<0.000000e+00> : vector<8x128xf32>
    %2 = tpu.matmul %0, %1, %cst {dimension_numbers = #tpu.dot_dimension_numbers<[1], [1], [0], [0], [0, 0, 1, 0], [], []>} : vector<8x32xf32>, vector<128x32xf32>, vector<8x128xf32> -> vector<8x128xf32>
    %c0_3 = arith.constant 0 : index
    %c0_4 = arith.constant 0 : index
    %3 = vector.load %arg3[%c0_3, %c0_4] : memref<1x128xf32, #tpu.memory_space<vmem>>, vector<1x128xf32>
    %4 = vector.broadcast %3 : vector<1x128xf32> to vector<8x128xf32>
    %5 = arith.addf %2, %4 : vector<8x128xf32>
    %c0_5 = arith.constant 0 : index
    %c0_6 = arith.constant 0 : index
    %6 = vector.load %arg4[%c0_5, %c0_6] : memref<8x128xf32, #tpu.memory_space<vmem>>, vector<8x128xf32>
    tpu.vector_store %arg4[%c0_5, %c0_6], %5 {strides = array<i32>} : memref<8x128xf32, #tpu.memory_space<vmem>>, vector<8x128xf32>,
    return
  }
  func.func @transform_0(%arg0: i32) -> (i32, i32) {
    %c0_i32 = arith.constant 0 : i32
    %c0_i32_0 = arith.constant 0 : i32
    return %arg0, %c0_i32 : i32, i32
  }
  func.func @transform_1(%arg0: i32) -> (i32, i32) {
    %c0_i32 = arith.constant 0 : i32
    %c0_i32_0 = arith.constant 0 : i32
    %c0_i32_1 = arith.constant 0 : i32
    return %c0_i32, %c0_i32_0 : i32, i32
  }
  func.func @transform_2(%arg0: i32) -> (i32, i32) {
    %c0_i32 = arith.constant 0 : i32
    %c0_i32_0 = arith.constant 0 : i32
    %c0_i32_1 = arith.constant 0 : i32
    return %c0_i32, %c0_i32_0 : i32, i32
  }
  func.func @transform_3(%arg0: i32) -> (i32, i32) {
    %c0_i32 = arith.constant 0 : i32
    %c0_i32_0 = arith.constant 0 : i32
    return %arg0, %c0_i32 : i32, i32
  }
}

</mosaic_0001>

<llo_original>
// kernel: tpu_custom_call.1
$region0: #{tpu_custom_call.1}
  #allocation0 [shape = 'u32[]', space=smem, size = 0x4, offset = 0x4, fixed_abs, tag = 'smem constant byte address 0x4 - core index']
  #allocation1 [shape = 'u32[72,128]{1,0:T(1,128)}', space=vmem, size = 0x9000, scoped, tag = 'internal scratch']
  %s0 = inlined_call_operand.vmem [shape: f32[16,32], index: 0, kind: input, shape index: {}]
  %s1 = inlined_call_operand.vmem [shape: f32[128,32], index: 1, kind: input, shape index: {}]
  %s2 = inlined_call_operand.vmem [shape: f32[1,128], index: 2, kind: input, shape index: {}]
  %s3 = inlined_call_operand.hbm [shape: f32[16,128], index: 3, kind: output, shape index: {}]
  %s4 = sld [smem:[#allocation0]]
  $region45: #{tpu_custom_call.1} parent=0
    _
  %s6 = ssub.s32 1, %s4
  %s7 = scalar_select 0, %s6, %s4
  $region1: #{tpu_custom_call.1} parent=0
    #allocation2 [shape = 'u8[8192]{0}', space=vmem, size = 0x2000, scoped, tag = 'output window, operand 0']
    #allocation3 [shape = 's32[2]{0}', space=sflag, size = 0x8, scoped, tag = 'scoped memory for tpu_custom_call.1']
    %8 = vsyncpa [#allocation3], 0
    %s9 = scalar_lea.sflag [#allocation3], 1
    %10 = vsyncpa %s9, 0
    loop: start=0, step=1, limit=4
    $region2: #{tpu_custom_call.1} parent=1 // loop_pre_header
      _
    $region3: #{tpu_custom_call.1} parent=1 // loop_header
      %s12 = sphi 0, %s16
      %p13 = scmp.ge.s32.totalorder %s12, 4
      %s22 = sphi 0, %s24
      %s25 = sphi 0, %s22
      %s26 = sphi 0, %s25
      %s42 = sphi 0, %s26
      %s46 = sphi 0, %s46
      %s48 = sphi 0, %s46
      %s49 = sphi 0, %s48
      %s63 = sphi 0, %s49
      %s67 = sphi 0, %s67
      %s69 = sphi 0, %s67
      %s70 = sphi 0, %s69
      %s84 = sphi 0, %s70
      %s90 = sphi 0, %s92
      %s93 = sphi 0, %s90
      %s94 = sphi 0, %s93
      %s110 = sphi 0, %s94
    $region4: #{tpu_custom_call.1} parent=1 // loop_header_branch
      %15 = sbr.rel (%p13) target = $region8
    $region5: #{tpu_custom_call.1} parent=1 // loop_body
      %s17 = ssub.s32 %s12, 1
      %s18 = ssub.s32 %s12, 2
      %s19 = sadd.s32 %s12, 1
      %s20 = ssub.s32 %s12, %s19
      %p21 = scmp.eq.s32.totalorder %s20, 0
      %s23 = sadd.s32 %s22, 1
      %s24 = scalar_select %p21, %s22, %s23
      %p27 = pneg %p21
      %p28 = scmp.eq.s32.totalorder %s12, 1
      %p29 = por %p27, %p28
      %p30 = scmp.ne.s32.totalorder %s22, %s25
      %p31 = scmp.eq.s32.totalorder %s12, 0
      %p32 = por %p30, %p31
      %p33 = scmp.ne.s32.totalorder %s22, %s25
      %p34 = scmp.eq.s32.totalorder %s17, 1
      %p35 = por %p33, %p34
      %p36 = scmp.ne.s32.totalorder %s25, %s26
      %p37 = scmp.eq.s32.totalorder %s17, 0
      %p38 = por %p36, %p37
      %p39 = scmp.ne.s32.totalorder %s25, %s26
      %p40 = scmp.eq.s32.totalorder %s18, 1
      %p41 = por %p39, %p40
      %p43 = scmp.ne.s32.totalorder %s26, %s42
      %p44 = scmp.eq.s32.totalorder %s18, 0
      %p45 = por %p43, %p44
      %s47 = sadd.s32 %s46, 1
      %p50 = scmp.eq.s32.totalorder %s12, 1
      %p51 = scmp.ne.s32.totalorder %s46, %s48
      %p52 = scmp.eq.s32.totalorder %s12, 0
      %p53 = por %p51, %p52
      %p54 = scmp.ne.s32.totalorder %s46, %s48
      %p55 = scmp.eq.s32.totalorder %s17, 1
      %p56 = por %p54, %p55
      %p57 = scmp.ne.s32.totalorder %s48, %s49
      %p58 = scmp.eq.s32.totalorder %s17, 0
      %p59 = por %p57, %p58
      %p60 = scmp.ne.s32.totalorder %s48, %s49
      %p61 = scmp.eq.s32.totalorder %s18, 1
      %p62 = por %p60, %p61
      %p64 = scmp.ne.s32.totalorder %s49, %s63
      %p65 = scmp.eq.s32.totalorder %s18, 0
      %p66 = por %p64, %p65
      %s68 = sadd.s32 %s67, 1
      %p71 = scmp.eq.s32.totalorder %s12, 1
      %p72 = scmp.ne.s32.totalorder %s67, %s69
      %p73 = scmp.eq.s32.totalorder %s12, 0
      %p74 = por %p72, %p73
      %p75 = scmp.ne.s32.totalorder %s67, %s69
      %p76 = scmp.eq.s32.totalorder %s17, 1
      %p77 = por %p75, %p76
      %p78 = scmp.ne.s32.totalorder %s69, %s70
      %p79 = scmp.eq.s32.totalorder %s17, 0
      %p80 = por %p78, %p79
      %p81 = scmp.ne.s32.totalorder %s69, %s70
      %p82 = scmp.eq.s32.totalorder %s18, 1
      %p83 = por %p81, %p82
      %p85 = scmp.ne.s32.totalorder %s70, %s84
      %p86 = scmp.eq.s32.totalorder %s18, 0
      %p87 = por %p85, %p86
      %s88 = ssub.s32 %s12, %s19
      %p89 = scmp.eq.s32.totalorder %s88, 0
      %s91 = sadd.s32 %s90, 1
      %s92 = scalar_select %p89, %s90, %s91
      %p95 = pneg %p89
      %p96 = scmp.eq.s32.totalorder %s12, 1
      %p97 = por %p95, %p96
      %p98 = scmp.ne.s32.totalorder %s90, %s93
      %p99 = scmp.eq.s32.totalorder %s12, 0
      %p100 = por %p98, %p99
      %p101 = scmp.ne.s32.totalorder %s90, %s93
      %p102 = scmp.eq.s32.totalorder %s17, 1
      %p103 = por %p101, %p102
      %p104 = scmp.ne.s32.totalorder %s93, %s94
      %p105 = scmp.eq.s32.totalorder %s17, 0
      %p106 = por %p104, %p105
      %p107 = scmp.ne.s32.totalorder %s93, %s94
      %p108 = scmp.eq.s32.totalorder %s18, 1
      %p109 = por %p107, %p108
      %p111 = scmp.ne.s32.totalorder %s94, %s110
      %p112 = scmp.eq.s32.totalorder %s18, 0
      %p113 = por %p111, %p112
      %p114 = scmp.le.s32.totalorder 1, %s12
      %p115 = scmp.lt.s32.totalorder %s12, 3
      %p116 = pnand %p114, %p115
      %p117 = pneg %p116
      // Predicated region
      $region9: #{tpu_custom_call.1} parent=5 // pred_check
        _
      $region10: #{tpu_custom_call.1} parent=5 // pred_check_branch
        %119 = sbr.rel (%p116) target = $region12
      $region11: #{tpu_custom_call.1} parent=5 // pred_region
        %s120 = ssub.s32 %s12, 1
        // Predicated region
        $region13: #{tpu_custom_call.1} parent=11 // pred_check
          %p121 = pneg %p59
        $region14: #{tpu_custom_call.1} parent=11 // pred_check_branch
          %123 = sbr.rel (%p121) target = $region16
        $region15: #{tpu_custom_call.1} parent=11 // pred_region
          _
        $region16: #{tpu_custom_call.1} parent=11 // pred_fallthru
          _
        // Predicated region
        $region17: #{tpu_custom_call.1} parent=11 // pred_check
          %p124 = pneg %p80
        $region18: #{tpu_custom_call.1} parent=11 // pred_check_branch
          %126 = sbr.rel (%p124) target = $region20
        $region19: #{tpu_custom_call.1} parent=11 // pred_region
          _
        $region20: #{tpu_custom_call.1} parent=11 // pred_fallthru
          _
      $region12: #{tpu_custom_call.1} parent=5 // pred_fallthru
        _
      %p127 = scmp.lt.s32.totalorder %s12, 2
      // Predicated region
      $region21: #{tpu_custom_call.1} parent=5 // pred_check
        %p128 = pneg %p127
      $region22: #{tpu_custom_call.1} parent=5 // pred_check_branch
        %130 = sbr.rel (%p128) target = $region24
      $region23: #{tpu_custom_call.1} parent=5 // pred_region
        // Predicated region
        $region25: #{tpu_custom_call.1} parent=23 // pred_check
          %p131 = pneg %p32
        $region26: #{tpu_custom_call.1} parent=23 // pred_check_branch
          %133 = sbr.rel (%p131) target = $region28
        $region27: #{tpu_custom_call.1} parent=23 // pred_region
          %p134 = scmp.lt.s32.totalorder %s12, 1
          %s135 = scalar_select %p134, %s12, 1
          %s136 = smul.addr %s135, 8
          %s137 = scalar_lea.vmem %s0, %s136
        $region28: #{tpu_custom_call.1} parent=23 // pred_fallthru
          _
      $region24: #{tpu_custom_call.1} parent=5 // pred_fallthru
        _
      %p138 = scmp.le.s32.totalorder 1, %s12
      %p139 = scmp.lt.s32.totalorder %s12, 3
      %p140 = pnand %p138, %p139
      %p141 = pneg %p140
      // Predicated region
      $region29: #{tpu_custom_call.1} parent=5 // pred_check
        _
      $region30: #{tpu_custom_call.1} parent=5 // pred_check_branch
        %143 = sbr.rel (%p140) target = $region32
      $region31: #{tpu_custom_call.1} parent=5 // pred_region
        %s144 = ssub.s32 %s12, 1
        %p145 = scmp.lt.s32.totalorder %s17, 1
        %s146 = scalar_select %p145, %s17, 1
        %s147 = smul.addr %s146, 8
        %s148 = scalar_lea.vmem %s0, %s147
        %p149 = pneg %p38
        %p150 = pneg %p35
        %p151 = pneg %p59
        %p152 = pneg %p56
        %p153 = pneg %p80
        %p154 = pneg %p77
        %p155 = pneg %p106
        %p156 = pneg %p103
        %s157 = sand.u32 %s93, 1
        %s158 = scalar_lea.sflag [#allocation3], %s157
        %s159 = sand.u32 %s93, 1
        %s160 = smul.addr %s159, 8
        %s161 = scalar_lea.vmem [#allocation2], %s160
        %p162 = scmp.lt.s32.totalorder %s17, 1
        %s163 = scalar_select %p162, %s17, 1
        %s164 = smul.addr %s163, 8
        %s165 = scalar_lea.vmem %s0, %s164
        %v166 = vld [vmem:[%s165] sm:$0xff]
        %v167 = vld [vmem:[%s1] sm:$0xff]
        %v168 = vld [vmem:[%s1 + $0x8] sm:$0xff]
        %v169 = vld [vmem:[%s1 + $0x10] sm:$0xff]
        %v170 = vld [vmem:[%s1 + $0x18] sm:$0xff]
        %v171 = vld [vmem:[%s1 + $0x20] sm:$0xff]
        %v172 = vld [vmem:[%s1 + $0x28] sm:$0xff]
        %v173 = vld [vmem:[%s1 + $0x30] sm:$0xff]
        %v174 = vld [vmem:[%s1 + $0x38] sm:$0xff]
        %v175 = vld [vmem:[%s1 + $0x40] sm:$0xff]
        %v176 = vld [vmem:[%s1 + $0x48] sm:$0xff]
        %v177 = vld [vmem:[%s1 + $0x50] sm:$0xff]
        %v178 = vld [vmem:[%s1 + $0x58] sm:$0xff]
        %v179 = vld [vmem:[%s1 + $0x60] sm:$0xff]
        %v180 = vld [vmem:[%s1 + $0x68] sm:$0xff]
        %v181 = vld [vmem:[%s1 + $0x70] sm:$0xff]
        %v182 = vld [vmem:[%s1 + $0x78] sm:$0xff]
        %v183 = vld [vmem:[%s2] sm:$0x1]
        %v185 = vperm.slane %v183, 0
        %vm187 = vcmask 261120
        %v189 = vsel %vm187, %v166, 0
        %v192 = vsel %vm187, %v167, 0
        %v195 = vsel %vm187, %v168, 0
        %v198 = vsel %vm187, %v169, 0
        %v201 = vsel %vm187, %v170, 0
        %v204 = vsel %vm187, %v171, 0
        %v207 = vsel %vm187, %v172, 0
        %v210 = vsel %vm187, %v173, 0
        %v213 = vsel %vm187, %v174, 0
        %v216 = vsel %vm187, %v175, 0
        %v219 = vsel %vm187, %v176, 0
        %v222 = vsel %vm187, %v177, 0
        %v225 = vsel %vm187, %v178, 0
        %v228 = vsel %vm187, %v179, 0
        %v231 = vsel %vm187, %v180, 0
        %v234 = vsel %vm187, %v181, 0
        %v237 = vsel %vm187, %v182, 0
        %239 = vmatpush.xpose.msra.mxu0 %v237
        %240 = vmatpush.xpose.msra.mxu0 %v234
        %241 = vmatpush.xpose.msra.mxu0 %v231
        %242 = vmatpush.xpose.msra.mxu0 %v228
        %243 = vmatpush.xpose.msra.mxu0 %v225
        %244 = vmatpush.xpose.msra.mxu0 %v222
        %245 = vmatpush.xpose.msra.mxu0 %v219
        %246 = vmatpush.xpose.msra.mxu0 %v216
        %247 = vmatpush.xpose.msra.mxu0 %v213
        %248 = vmatpush.xpose.msra.mxu0 %v210
        %249 = vmatpush.xpose.msra.mxu0 %v207
        %250 = vmatpush.xpose.msra.mxu0 %v204
        %251 = vmatpush.xpose.msra.mxu0 %v201
        %252 = vmatpush.xpose.msra.mxu0 %v198
        %253 = vmatpush.xpose.msra.mxu0 %v195
        %254 = vmatpush.xpose.msra.mxu0 %v192
        %255 = vmatmul.f32.gmra.mxu0 %v189
        %v256 = vpop.f32.mrf.mxu0
        %v257 = vadd.f32 %v185, %v256
        %258 = vdwg.mxu0
        %259 = vst [vmem:[%s161] sm:$0xff] %v257
        %s260 = sand.u32 %s93, 1
        %s261 = scalar_lea.sflag [#allocation3], %s260
        %s262 = sand.u32 %s93, 1
        %s263 = smul.addr %s262, 8
        %s264 = scalar_lea.vmem [#allocation2], %s263
        // Predicated region
        $region33: #{tpu_custom_call.1} parent=31 // pred_check
          %p265 = pneg %p103
        $region34: #{tpu_custom_call.1} parent=31 // pred_check_branch
          %267 = sbr.rel (%p265) target = $region36
        $region35: #{tpu_custom_call.1} parent=31 // pred_region
          %269 = vsyncadd %s261, 0
          %s270 = smul.addr %s17, 8
          %s271 = scalar_lea.hbm %s3, %s270
          %s273 = sshll.u32 %s264, 4
          %s274 = int_to_ptr.vmem [resolvable:$true] %s273
          %s275 = sshll.u32 %s271, 4
          %s276 = int_to_ptr.hbm [resolvable:$true] %s275
          %278 = dma.vmem_to_hbm [thread:$0]  %s274, 128, %s276, %s261
        $region36: #{tpu_custom_call.1} parent=31 // pred_fallthru
          _
      $region32: #{tpu_custom_call.1} parent=5 // pred_fallthru
        _
      %p279 = scmp.le.s32.totalorder 2, %s12
      // Predicated region
      $region37: #{tpu_custom_call.1} parent=5 // pred_check
        %p280 = pneg %p279
      $region38: #{tpu_custom_call.1} parent=5 // pred_check_branch
        %282 = sbr.rel (%p280) target = $region40
      $region39: #{tpu_custom_call.1} parent=5 // pred_region
        %s283 = ssub.s32 %s12, 2
        // Predicated region
        $region41: #{tpu_custom_call.1} parent=39 // pred_check
          %p284 = pneg %p109
        $region42: #{tpu_custom_call.1} parent=39 // pred_check_branch
          %286 = sbr.rel (%p284) target = $region44
        $region43: #{tpu_custom_call.1} parent=39 // pred_region
          %s287 = sand.u32 %s94, 1
          %s288 = scalar_lea.sflag [#allocation3], %s287
          %s289 = sand.u32 %s94, 1
          %s290 = smul.addr %s289, 8
          %s291 = scalar_lea.vmem [#allocation2], %s290
          %293 = dma.done %s288, 128
        $region44: #{tpu_custom_call.1} parent=39 // pred_fallthru
          _
      $region40: #{tpu_custom_call.1} parent=5 // pred_fallthru
        _
    $region6: #{tpu_custom_call.1} parent=1 // loop_footer
      %s16 = sadd.s32 1, %s12
    $region7: #{tpu_custom_call.1} parent=1 // loop_footer_branch
      %11 = sbr.rel target = $region3
    $region8: #{tpu_custom_call.1} parent=1 // loop_exit
      _
    %294 = vsyncpa [#allocation3], 1
    %s295 = scalar_lea.sflag [#allocation3], 1
    %296 = vsyncpa %s295, 1

</llo_original>
